<compile_context>
chip_gen: v7x
topology: tpu7x:2x2x1
jax: 0.10.0
libtpu: 0.0.40
codegen_flags: <defaults>
</compile_context>

<pallas_src>
import math
import jax
import jax.numpy as jnp
from jax.experimental import pallas as pl
from jax.experimental.pallas import tpu as pltpu


# ---------------------------------------------------------------------------
# Fused kernel: all layers of the autoencoder in one pallas_call
# ---------------------------------------------------------------------------
def _make_fused_kernel(num_layers, middle_out_index):
    """Build a kernel fn: (x, w0, b0, ..., w{L-1}, b{L-1}, out, mid)."""

    def kernel(x_ref, *refs):
        w_refs = refs[0:2 * num_layers:2]
        b_refs = refs[1:2 * num_layers:2]
        out_ref = refs[2 * num_layers]
        mid_ref = refs[2 * num_layers + 1]

        # Activation stays VMEM/vreg-resident between layers (never hits HBM).
        act = x_ref[...]
        for l in range(num_layers):          # static unroll (layer list is fixed)
            acc = jnp.dot(act, w_refs[l][...],
                          preferred_element_type=jnp.float32)
            acc = acc + b_refs[l][...].astype(jnp.float32)   # (1, Dout) broadcast
            act = jnp.tanh(acc).astype(x_ref.dtype)
            if (l + 1) == middle_out_index:
                mid_ref[...] = act.astype(mid_ref.dtype)
        out_ref[...] = act.astype(out_ref.dtype)

    return kernel


def _pick_batch_tile(batch):
    """Largest convenient batch tile (multiple of 8) so v7x can shard batch."""
    if batch <= 256:
        return batch
    for tb in (512, 256, 128, 64, 32, 16, 8):
        if batch % tb == 0:
            return tb
    return batch


def fused_ae_forward(x, params, middle_out_index):
    """Run the whole autoencoder forward pass in a single Pallas kernel.

    Returns (out, middle_activation).
    """
    batch, din0 = x.shape
    num_layers = len(params)
    layer_dims = [(w.shape[0], w.shape[1]) for (w, _) in params]
    dout_last = layer_dims[-1][1]
    dmid = layer_dims[middle_out_index - 1][1]

    tb = _pick_batch_tile(batch)
    grid = (batch // tb,)

    flat_inputs = [x]
    in_specs = [pl.BlockSpec((tb, din0), lambda i: (i, 0))]
    for (w_t, b) in params:
        din, dout = w_t.shape
        flat_inputs.append(w_t)
        flat_inputs.append(b)                      # b already stored as (1, dout)
        in_specs.append(pl.BlockSpec((din, dout), lambda i: (0, 0)))
        in_specs.append(pl.BlockSpec((1, dout), lambda i: (0, 0)))

    out_specs = (
        pl.BlockSpec((tb, dout_last), lambda i: (i, 0)),
        pl.BlockSpec((tb, dmid), lambda i: (i, 0)),
    )
    out_shape = (
        jax.ShapeDtypeStruct((batch, dout_last), x.dtype),
        jax.ShapeDtypeStruct((batch, dmid), x.dtype),
    )

    # Rough VMEM requirement (double-buffered inputs + activations); only
    # raise the scoped limit when the default would be too small.
    param_bytes = sum(w.size * w.dtype.itemsize + b.size * b.dtype.itemsize
                      for (w, b) in params)
    act_bytes = tb * max([din0] + [d for (_, d) in layer_dims]) * x.dtype.itemsize
    needed = 2 * (param_bytes + tb * din0 * x.dtype.itemsize
                  + tb * (dout_last + dmid) * x.dtype.itemsize) + 8 * act_bytes
    cp_kwargs = dict(dimension_semantics=("parallel",))
    if needed > (24 << 20):
        cp_kwargs["vmem_limit_bytes"] = min(int(needed * 1.25) + (4 << 20), 120 << 20)

    kernel = _make_fused_kernel(num_layers, middle_out_index)
    return pl.pallas_call(
        kernel,
        grid=grid,
        in_specs=in_specs,
        out_specs=out_specs,
        out_shape=out_shape,
        compiler_params=pltpu.CompilerParams(**cp_kwargs),
    )(*flat_inputs)


# ---------------------------------------------------------------------------
# AELinearModel: layer-size construction mirrors the PyTorch __init__ paths
# ---------------------------------------------------------------------------
def _default_setup_sizes(input_size):
    """Mirror AELinearModel.default_setup: returns ([(in,out), ...], middle_out_index)."""
    i_size = input_size
    digits = 0
    while i_size > 9:
        i_size = i_size / 10
        digits += 1
    i_size = input_size
    o_size = round(input_size / (2 + digits - 1))
    middle_out_index = digits
    enc = []
    for d in range(1, digits + 1):
        enc.append((i_size, o_size))
        i_size = o_size
        o_size = round(i_size / (2 + digits - d - 1))
    dec = [(o, i) for (i, o) in reversed(enc)]
    return enc + dec, middle_out_index


def _create_layers_sizes(input_size, layer_num, middle_size):
    """Mirror AELinearModel.create_layers."""
    if input_size < middle_size:
        raise Exception('middle layer size is larger than input size')
    if layer_num % 2 == 0:
        half = layer_num // 2
        even = True
    else:
        half = math.ceil(layer_num / 2)
        even = False
    middle_out_index = half
    step = (input_size - middle_size) / half
    half_sizes = [input_size - math.floor(i * step) for i in range(0, half)]
    sizes = half_sizes.copy()
    sizes.append(middle_size)
    if even:
        sizes.append(middle_size)
    for v in reversed(half_sizes):
        sizes.append(v)
    pairs = []
    cur = input_size
    for out_sz in sizes[1:]:
        pairs.append((cur, out_sz))
        cur = out_sz
    return pairs, middle_out_index


class AELinearModelPallas:
    def __init__(self, input_size, hidden_layer_num=-1, middle_layer_size=-1,
                 out_middle_layer=False, key=None, dtype=jnp.float32):
        if hidden_layer_num == -1 and middle_layer_size == -1:
            layer_dims, self.middle_out_index = _default_setup_sizes(input_size)
        elif hidden_layer_num > 1 and middle_layer_size > 1:
            layer_dims, self.middle_out_index = _create_layers_sizes(
                input_size, hidden_layer_num, middle_layer_size)
        else:
            raise Exception('unsupported configuration')
        self.out_middle_layer = out_middle_layer
        self.middle_layer_output = None

        # Deterministic parameter init (PyTorch Linear-style uniform bounds).
        # Biases are stored as (1, Dout) so no reshape happens at call time.
        if key is None:
            key = jax.random.PRNGKey(0)
        self.params = []
        for (din, dout) in layer_dims:
            key, kw, kb = jax.random.split(key, 3)
            bound = 1.0 / math.sqrt(din)
            w_t = jax.random.uniform(kw, (din, dout), dtype, -bound, bound)  # (in, out) = W^T
            b = jax.random.uniform(kb, (1, dout), dtype, -bound, bound)
            self.params.append((w_t, b))

    def forward(self, x):
        out, mid = fused_ae_forward(x, self.params, int(self.middle_out_index))
        self.middle_layer_output = mid
        if self.out_middle_layer:
            # NOTE: original PyTorch code returns the boolean flag (not the
            # middle activation) as the second element — reproduced here.
            return (out, self.out_middle_layer)
        return out


# ---------------------------------------------------------------------------
if __name__ == "__main__":
    key = jax.random.PRNGKey(0)
    kx, kp1, kp2 = jax.random.split(key, 3)

    batch = 8
    input_size = 64
    x = jax.random.normal(kx, (batch, input_size), jnp.float32)

    def jax_reference(x, params):
        ref = x
        for (w_t, b) in params:
            ref = jnp.tanh(ref @ w_t + b)
        return ref

    # --- default_setup path: input_size=64 -> Linear(64,32), Linear(32,64) ---
    model = AELinearModelPallas(input_size=input_size, key=kp1)
    out = model.forward(x)
    jax.block_until_ready(out)
    jax.block_until_ready(model.middle_layer_output)

    assert out.shape == (batch, input_size)
    assert model.middle_layer_output.shape == (batch, 32)
    ref = jax_reference(x, model.params)
    assert jnp.allclose(out, ref, atol=1e-5, rtol=1e-5)
    ref_mid = jax_reference(x, model.params[:model.middle_out_index])
    assert jnp.allclose(model.middle_layer_output, ref_mid, atol=1e-5, rtol=1e-5)

    # --- create_layers path: 4 hidden layers, bottleneck 16, out_middle_layer ---
    model2 = AELinearModelPallas(input_size=input_size, hidden_layer_num=4,
                                 middle_layer_size=16, out_middle_layer=True,
                                 key=kp2)
    out2, flag = model2.forward(x)
    jax.block_until_ready(out2)
    jax.block_until_ready(model2.middle_layer_output)

    assert flag is True                       # original module returns the flag
    assert out2.shape == (batch, input_size)
    assert model2.middle_layer_output.shape == (batch, 16)
    ref2 = jax_reference(x, model2.params)
    assert jnp.allclose(out2, ref2, atol=1e-5, rtol=1e-5)
    ref2_mid = jax_reference(x, model2.params[:model2.middle_out_index])
    assert jnp.allclose(model2.middle_layer_output, ref2_mid, atol=1e-5, rtol=1e-5)

    print("KERNEL_OK")
</pallas_src>

<mosaic_0001>
module attributes {stable_mosaic.version = 11 : i64} {
  func.func @kernel(%arg0: i32, %arg1: memref<8x64xf32, #tpu.memory_space<vmem>>, %arg2: memref<64x32xf32, #tpu.memory_space<vmem>>, %arg3: memref<1x32xf32, #tpu.memory_space<vmem>>, %arg4: memref<32x64xf32, #tpu.memory_space<vmem>>, %arg5: memref<1x64xf32, #tpu.memory_space<vmem>>, %arg6: memref<8x64xf32, #tpu.memory_space<vmem>>, %arg7: memref<8x32xf32, #tpu.memory_space<vmem>>) attributes {dimension_semantics = [#tpu.dimension_semantics<parallel>], iteration_bounds = array<i64: 1>, scalar_prefetch = 0 : i64, scratch_operands = 0 : i64, tpu.core_type = #tpu.core_type<tc>, window_params = [{transform_indices = @transform_0, window_bounds = array<i64: 8, 64>}, {pipeline_mode = #tpu.pipeline_mode<synchronous>, transform_indices = @transform_1, window_bounds = array<i64: 64, 32>}, {pipeline_mode = #tpu.pipeline_mode<synchronous>, transform_indices = @transform_2, window_bounds = array<i64: 1, 32>}, {pipeline_mode = #tpu.pipeline_mode<synchronous>, transform_indices = @transform_3, window_bounds = array<i64: 32, 64>}, {pipeline_mode = #tpu.pipeline_mode<synchronous>, transform_indices = @transform_4, window_bounds = array<i64: 1, 64>}, {transform_indices = @transform_5, window_bounds = array<i64: 8, 64>}, {transform_indices = @transform_6, window_bounds = array<i64: 8, 32>}]} {
    %c0 = arith.constant 0 : index
    %c0_0 = arith.constant 0 : index
    %0 = vector.load %arg1[%c0, %c0_0] : memref<8x64xf32, #tpu.memory_space<vmem>>, vector<8x64xf32>
    %c0_1 = arith.constant 0 : index
    %c0_2 = arith.constant 0 : index
    %1 = vector.load %arg2[%c0_1, %c0_2] : memref<64x32xf32, #tpu.memory_space<vmem>>, vector<64x32xf32>
    %cst = arith.constant dense<0.000000e+00> : vector<8x32xf32>
    %2 = tpu.matmul %0, %1, %cst {dimension_numbers = #tpu.dot_dimension_numbers<[1], [0], [0], [1], [0, 0, 1, 1], [], []>} : vector<8x64xf32>, vector<64x32xf32>, vector<8x32xf32> -> vector<8x32xf32>
    %c0_3 = arith.constant 0 : index
    %c0_4 = arith.constant 0 : index
    %3 = vector.load %arg3[%c0_3, %c0_4] : memref<1x32xf32, #tpu.memory_space<vmem>>, vector<1x32xf32>
    %4 = vector.broadcast %3 : vector<1x32xf32> to vector<8x32xf32>
    %5 = arith.addf %2, %4 : vector<8x32xf32>
    %6 = math.tanh %5 : vector<8x32xf32>
    %c0_5 = arith.constant 0 : index
    %c0_6 = arith.constant 0 : index
    %7 = vector.load %arg7[%c0_5, %c0_6] : memref<8x32xf32, #tpu.memory_space<vmem>>, vector<8x32xf32>
    tpu.vector_store %arg7[%c0_5, %c0_6], %6 {strides = array<i32>} : memref<8x32xf32, #tpu.memory_space<vmem>>, vector<8x32xf32>,
    %c0_7 = arith.constant 0 : index
    %c0_8 = arith.constant 0 : index
    %8 = vector.load %arg4[%c0_7, %c0_8] : memref<32x64xf32, #tpu.memory_space<vmem>>, vector<32x64xf32>
    %cst_9 = arith.constant dense<0.000000e+00> : vector<8x64xf32>
    %9 = tpu.matmul %6, %8, %cst_9 {dimension_numbers = #tpu.dot_dimension_numbers<[1], [0], [0], [1], [0, 0, 1, 1], [], []>} : vector<8x32xf32>, vector<32x64xf32>, vector<8x64xf32> -> vector<8x64xf32>
    %c0_10 = arith.constant 0 : index
    %c0_11 = arith.constant 0 : index
    %10 = vector.load %arg5[%c0_10, %c0_11] : memref<1x64xf32, #tpu.memory_space<vmem>>, vector<1x64xf32>
    %11 = vector.broadcast %10 : vector<1x64xf32> to vector<8x64xf32>
    %12 = arith.addf %9, %11 : vector<8x64xf32>
    %13 = math.tanh %12 : vector<8x64xf32>
    %c0_12 = arith.constant 0 : index
    %c0_13 = arith.constant 0 : index
    %14 = vector.load %arg6[%c0_12, %c0_13] : memref<8x64xf32, #tpu.memory_space<vmem>>, vector<8x64xf32>
    tpu.vector_store %arg6[%c0_12, %c0_13], %13 {strides = array<i32>} : memref<8x64xf32, #tpu.memory_space<vmem>>, vector<8x64xf32>,
    return
  }
  func.func @transform_0(%arg0: i32) -> (i32, i32) {
    %c0_i32 = arith.constant 0 : i32
    %c0_i32_0 = arith.constant 0 : i32
    return %arg0, %c0_i32 : i32, i32
  }
  func.func @transform_1(%arg0: i32) -> (i32, i32) {
    %c0_i32 = arith.constant 0 : i32
    %c0_i32_0 = arith.constant 0 : i32
    %c0_i32_1 = arith.constant 0 : i32
    return %c0_i32, %c0_i32_0 : i32, i32
  }
  func.func @transform_2(%arg0: i32) -> (i32, i32) {
    %c0_i32 = arith.constant 0 : i32
    %c0_i32_0 = arith.constant 0 : i32
    %c0_i32_1 = arith.constant 0 : i32
    return %c0_i32, %c0_i32_0 : i32, i32
  }
  func.func @transform_3(%arg0: i32) -> (i32, i32) {
    %c0_i32 = arith.constant 0 : i32
    %c0_i32_0 = arith.constant 0 : i32
    %c0_i32_1 = arith.constant 0 : i32
    return %c0_i32, %c0_i32_0 : i32, i32
  }
  func.func @transform_4(%arg0: i32) -> (i32, i32) {
    %c0_i32 = arith.constant 0 : i32
    %c0_i32_0 = arith.constant 0 : i32
    %c0_i32_1 = arith.constant 0 : i32
    return %c0_i32, %c0_i32_0 : i32, i32
  }
  func.func @transform_5(%arg0: i32) -> (i32, i32) {
    %c0_i32 = arith.constant 0 : i32
    %c0_i32_0 = arith.constant 0 : i32
    return %arg0, %c0_i32 : i32, i32
  }
  func.func @transform_6(%arg0: i32) -> (i32, i32) {
    %c0_i32 = arith.constant 0 : i32
    %c0_i32_0 = arith.constant 0 : i32
    return %arg0, %c0_i32 : i32, i32
  }
}

</mosaic_0001>

<llo_original>
// kernel: tpu_custom_call.1
$region0: #{tpu_custom_call.1}
  #allocation0 [shape = 'u32[]', space=smem, size = 0x4, offset = 0x4, fixed_abs, tag = 'smem constant byte address 0x4 - core index']
  #allocation1 [shape = 'u32[144,128]{1,0:T(1,128)}', space=vmem, size = 0x12000, scoped, tag = 'internal scratch']
  %s0 = inlined_call_operand.vmem [shape: f32[8,64], index: 0, kind: input, shape index: {}]
  %s1 = inlined_call_operand.vmem [shape: f32[64,32], index: 1, kind: input, shape index: {}]
  %s2 = inlined_call_operand.vmem [shape: f32[1,32], index: 2, kind: input, shape index: {}]
  %s3 = inlined_call_operand.vmem [shape: f32[32,64], index: 3, kind: input, shape index: {}]
  %s4 = inlined_call_operand.vmem [shape: f32[1,64], index: 4, kind: input, shape index: {}]
  %s5 = inlined_call_operand.hbm [shape: f32[8,64], index: 5, kind: output, shape index: {0}]
  %s6 = inlined_call_operand.hbm [shape: f32[8,32], index: 6, kind: output, shape index: {1}]
  %7 = xla_tuple %s5, %s6
  %s8 = sld [smem:[#allocation0]]
  $region38: #{tpu_custom_call.1} parent=0
    _
  %s10 = ssub.s32 1, %s8
  %s11 = scalar_select 0, %s10, %s8
  $region1: #{tpu_custom_call.1} parent=0
    #allocation2 [shape = 'u8[4096]{0}', space=vmem, size = 0x1000, scoped, tag = 'output window, operand 0, single buffered']
    #allocation3 [shape = 's32[1]{0}', space=sflag, size = 0x4, scoped, tag = 'scoped memory for tpu_custom_call.1']
    #allocation4 [shape = 'u8[4096]{0}', space=vmem, size = 0x1000, scoped, tag = 'output window, operand 1, single buffered']
    #allocation5 [shape = 's32[1]{0}', space=sflag, size = 0x4, scoped, tag = 'scoped memory for tpu_custom_call.1']
    %12 = vsyncpa [#allocation3], 0
    %13 = vsyncpa [#allocation5], 0
    // Predicated region
    $region2: #{tpu_custom_call.1} parent=1 // pred_check
      _
    $region3: #{tpu_custom_call.1} parent=1 // pred_check_branch
      %15 = sbr.rel (0) target = $region5
    $region4: #{tpu_custom_call.1} parent=1 // pred_region
      _
    $region5: #{tpu_custom_call.1} parent=1 // pred_fallthru
      _
    // Predicated region
    $region6: #{tpu_custom_call.1} parent=1 // pred_check
      _
    $region7: #{tpu_custom_call.1} parent=1 // pred_check_branch
      %17 = sbr.rel (0) target = $region9
    $region8: #{tpu_custom_call.1} parent=1 // pred_region
      _
    $region9: #{tpu_custom_call.1} parent=1 // pred_fallthru
      _
    // Predicated region
    $region10: #{tpu_custom_call.1} parent=1 // pred_check
      _
    $region11: #{tpu_custom_call.1} parent=1 // pred_check_branch
      %19 = sbr.rel (0) target = $region13
    $region12: #{tpu_custom_call.1} parent=1 // pred_region
      _
    $region13: #{tpu_custom_call.1} parent=1 // pred_fallthru
      _
    // Predicated region
    $region14: #{tpu_custom_call.1} parent=1 // pred_check
      _
    $region15: #{tpu_custom_call.1} parent=1 // pred_check_branch
      %21 = sbr.rel (0) target = $region17
    $region16: #{tpu_custom_call.1} parent=1 // pred_region
      _
    $region17: #{tpu_custom_call.1} parent=1 // pred_fallthru
      _
    // Predicated region
    $region18: #{tpu_custom_call.1} parent=1 // pred_check
      _
    $region19: #{tpu_custom_call.1} parent=1 // pred_check_branch
      %23 = sbr.rel (0) target = $region21
    $region20: #{tpu_custom_call.1} parent=1 // pred_region
      _
    $region21: #{tpu_custom_call.1} parent=1 // pred_fallthru
      _
    %v24 = vld [vmem:[%s0] sm:$0xff]
    %v25 = vld [vmem:[%s1] sm:$0xff]
    %v26 = vld [vmem:[%s1 + $0x8] sm:$0xff]
    %v27 = vld [vmem:[%s1 + $0x10] sm:$0xff]
    %v28 = vld [vmem:[%s1 + $0x18] sm:$0xff]
    %v29 = vld [vmem:[%s1 + $0x20] sm:$0xff]
    %v30 = vld [vmem:[%s1 + $0x28] sm:$0xff]
    %v31 = vld [vmem:[%s1 + $0x30] sm:$0xff]
    %v32 = vld [vmem:[%s1 + $0x38] sm:$0xff]
    %v33 = vld [vmem:[%s2] sm:$0x1]
    %v35 = vlaneseq
    %v36 = vshrl.u32 %v35, 7
    %v37 = vsub.s32 0, %v36
    %v38 = vrot.slane %v33, %v37
    %vm40 = vcmask 523264
    %v42 = vsel %vm40, %v24, 0
    %44 = vmatprep.subr.mxu0 0.0
    %45 = vmatpush1.msra.mxu0 %v25
    %46 = vmatprep.subr.mxu0 0.0
    %47 = vmatpush1.msra.mxu0 %v26
    %48 = vmatprep.subr.mxu0 0.0
    %49 = vmatpush1.msra.mxu0 %v27
    %50 = vmatprep.subr.mxu0 0.0
    %51 = vmatpush1.msra.mxu0 %v28
    %52 = vmatprep.subr.mxu0 0.0
    %53 = vmatpush1.msra.mxu0 %v29
    %54 = vmatprep.subr.mxu0 0.0
    %55 = vmatpush1.msra.mxu0 %v30
    %56 = vmatprep.subr.mxu0 0.0
    %57 = vmatpush1.msra.mxu0 %v31
    %58 = vmatprep.subr.mxu0 0.0
    %59 = vmatpush1.msra.mxu0 %v32
    %60 = vmatprep.subr.mxu0 0.0
    %61 = vmatpush1.msra.mxu0 0.0
    %62 = vmatprep.subr.mxu0 0.0
    %63 = vmatpush1.msra.mxu0 0.0
    %64 = vmatprep.subr.mxu0 0.0
    %65 = vmatpush1.msra.mxu0 0.0
    %66 = vmatprep.subr.mxu0 0.0
    %67 = vmatpush1.msra.mxu0 0.0
    %68 = vmatprep.subr.mxu0 0.0
    %69 = vmatpush1.msra.mxu0 0.0
    %70 = vmatprep.subr.mxu0 0.0
    %71 = vmatpush1.msra.mxu0 0.0
    %72 = vmatprep.subr.mxu0 0.0
    %73 = vmatpush1.msra.mxu0 0.0
    %74 = vmatprep.subr.mxu0 0.0
    %75 = vmatpush1.msra.mxu0 0.0
    %76 = vmatprep.subr.mxu0 0.0
    %77 = vmatpush1.msra.mxu0 0.0
    %78 = vmatprep.subr.mxu0 0.0
    %79 = vmatpush1.msra.mxu0 0.0
    %80 = vmatprep.subr.mxu0 0.0
    %81 = vmatpush1.msra.mxu0 0.0
    %82 = vmatprep.subr.mxu0 0.0
    %83 = vmatpush1.msra.mxu0 0.0
    %84 = vmatprep.subr.mxu0 0.0
    %85 = vmatpush1.msra.mxu0 0.0
    %86 = vmatprep.subr.mxu0 0.0
    %87 = vmatpush1.msra.mxu0 0.0
    %88 = vmatprep.subr.mxu0 0.0
    %89 = vmatpush1.msra.mxu0 0.0
    %90 = vmatprep.subr.mxu0 0.0
    %91 = vmatpush1.msra.mxu0 0.0
    %92 = vmatprep.subr.mxu0 0.0
    %93 = vmatpush1.msra.mxu0 0.0
    %94 = vmatprep.subr.mxu0 0.0
    %95 = vmatpush1.msra.mxu0 0.0
    %96 = vmatprep.subr.mxu0 0.0
    %97 = vmatpush1.msra.mxu0 0.0
    %98 = vmatprep.subr.mxu0 0.0
    %99 = vmatpush1.msra.mxu0 0.0
    %100 = vmatprep.subr.mxu0 0.0
    %101 = vmatpush1.msra.mxu0 0.0
    %102 = vmatprep.subr.mxu0 0.0
    %103 = vmatpush1.msra.mxu0 0.0
    %104 = vmatprep.subr.mxu0 0.0
    %105 = vmatpush1.msra.mxu0 0.0
    %106 = vmatprep.subr.mxu0 0.0
    %107 = vmatpush1.msra.mxu0 0.0
    %108 = vmatprep.mubr.f32.mxu0 0.0
    %109 = vmatmul.mubr.f32.gmra.mrb[0].mxu0 %v42
    %v110 = vpop.f32.mrb[0].mxu0
    %v111 = vadd.f32 %v38, %v110
    %v112 = vpop.f32.mrb[0].mxu0
    %113 = vdwg.mxu0
    %v114 = vtanh.pop %v111
    %vm115 = vcmask 261120
    %116 = vst.msk [vmem:[#allocation4] sm:$0xff] %vm115, %v114
    %v117 = vld [vmem:[%s3] sm:$0xff]
    %v118 = vld [vmem:[%s3 + $0x8] sm:$0xff]
    %v119 = vld [vmem:[%s3 + $0x10] sm:$0xff]
    %v120 = vld [vmem:[%s3 + $0x18] sm:$0xff]
    %v121 = vld [vmem:[%s4] sm:$0x1]
    %v123 = vlaneseq
    %v124 = vshrl.u32 %v123, 7
    %v125 = vsub.s32 0, %v124
    %v126 = vrot.slane %v121, %v125
    %v129 = vsel %vm115, %v114, 0
    %131 = vmatprep.subr.mxu0 0.0
    %132 = vmatpush1.msra.mxu0 %v117
    %133 = vmatprep.subr.mxu0 0.0
    %134 = vmatpush1.msra.mxu0 %v118
    %135 = vmatprep.subr.mxu0 0.0
    %136 = vmatpush1.msra.mxu0 %v119
    %137 = vmatprep.subr.mxu0 0.0
    %138 = vmatpush1.msra.mxu0 %v120
    %139 = vmatprep.subr.mxu0 0.0
    %140 = vmatpush1.msra.mxu0 0.0
    %141 = vmatprep.subr.mxu0 0.0
    %142 = vmatpush1.msra.mxu0 0.0
    %143 = vmatprep.subr.mxu0 0.0
    %144 = vmatpush1.msra.mxu0 0.0
    %145 = vmatprep.subr.mxu0 0.0
    %146 = vmatpush1.msra.mxu0 0.0
    %147 = vmatprep.subr.mxu0 0.0
    %148 = vmatpush1.msra.mxu0 0.0
    %149 = vmatprep.subr.mxu0 0.0
    %150 = vmatpush1.msra.mxu0 0.0
    %151 = vmatprep.subr.mxu0 0.0
    %152 = vmatpush1.msra.mxu0 0.0
    %153 = vmatprep.subr.mxu0 0.0
    %154 = vmatpush1.msra.mxu0 0.0
    %155 = vmatprep.subr.mxu0 0.0
    %156 = vmatpush1.msra.mxu0 0.0
    %157 = vmatprep.subr.mxu0 0.0
    %158 = vmatpush1.msra.mxu0 0.0
    %159 = vmatprep.subr.mxu0 0.0
    %160 = vmatpush1.msra.mxu0 0.0
    %161 = vmatprep.subr.mxu0 0.0
    %162 = vmatpush1.msra.mxu0 0.0
    %163 = vmatprep.subr.mxu0 0.0
    %164 = vmatpush1.msra.mxu0 0.0
    %165 = vmatprep.subr.mxu0 0.0
    %166 = vmatpush1.msra.mxu0 0.0
    %167 = vmatprep.subr.mxu0 0.0
    %168 = vmatpush1.msra.mxu0 0.0
    %169 = vmatprep.subr.mxu0 0.0
    %170 = vmatpush1.msra.mxu0 0.0
    %171 = vmatprep.subr.mxu0 0.0
    %172 = vmatpush1.msra.mxu0 0.0
    %173 = vmatprep.subr.mxu0 0.0
    %174 = vmatpush1.msra.mxu0 0.0
    %175 = vmatprep.subr.mxu0 0.0
    %176 = vmatpush1.msra.mxu0 0.0
    %177 = vmatprep.subr.mxu0 0.0
    %178 = vmatpush1.msra.mxu0 0.0
    %179 = vmatprep.subr.mxu0 0.0
    %180 = vmatpush1.msra.mxu0 0.0
    %181 = vmatprep.subr.mxu0 0.0
    %182 = vmatpush1.msra.mxu0 0.0
    %183 = vmatprep.subr.mxu0 0.0
    %184 = vmatpush1.msra.mxu0 0.0
    %185 = vmatprep.subr.mxu0 0.0
    %186 = vmatpush1.msra.mxu0 0.0
    %187 = vmatprep.subr.mxu0 0.0
    %188 = vmatpush1.msra.mxu0 0.0
    %189 = vmatprep.subr.mxu0 0.0
    %190 = vmatpush1.msra.mxu0 0.0
    %191 = vmatprep.subr.mxu0 0.0
    %192 = vmatpush1.msra.mxu0 0.0
    %193 = vmatprep.subr.mxu0 0.0
    %194 = vmatpush1.msra.mxu0 0.0
    %195 = vmatprep.mubr.f32.mxu0 0.0
    %196 = vmatmul.mubr.f32.gmra.mrb[0].mxu0 %v129
    %v197 = vpop.f32.mrb[0].mxu0
    %v198 = vadd.f32 %v126, %v197
    %v199 = vpop.f32.mrb[0].mxu0
    %200 = vdwg.mxu0
    %v201 = vtanh.pop %v198
    %202 = vst.msk [vmem:[#allocation2] sm:$0xff] %vm40, %v201
    // Predicated region
    $region22: #{tpu_custom_call.1} parent=1 // pred_check
      _
    $region23: #{tpu_custom_call.1} parent=1 // pred_check_branch
      %204 = sbr.rel (0) target = $region25
    $region24: #{tpu_custom_call.1} parent=1 // pred_region
      %s206 = ssub.s32 128, 128
      %207 = vsyncadd [#allocation3], %s206
      %s209 = sshll.u32 [#allocation2], 4
      %s210 = int_to_ptr.vmem [resolvable:$true] %s209
      %212 = dma.vmem_to_hbm [thread:$0]  %s210, 128, %s5, [#allocation3]
    $region25: #{tpu_custom_call.1} parent=1 // pred_fallthru
      _
    // Predicated region
    $region26: #{tpu_custom_call.1} parent=1 // pred_check
      _
    $region27: #{tpu_custom_call.1} parent=1 // pred_check_branch
      %214 = sbr.rel (0) target = $region29
    $region28: #{tpu_custom_call.1} parent=1 // pred_region
      %s216 = ssub.s32 128, 128
      %217 = vsyncadd [#allocation5], %s216
      %s219 = sshll.u32 [#allocation4], 4
      %s220 = int_to_ptr.vmem [resolvable:$true] %s219
      %222 = dma.vmem_to_hbm [thread:$0]  %s220, 128, %s6, [#allocation5]
    $region29: #{tpu_custom_call.1} parent=1 // pred_fallthru
      _
    // Predicated region
    $region30: #{tpu_custom_call.1} parent=1 // pred_check
      _
    $region31: #{tpu_custom_call.1} parent=1 // pred_check_branch
      %224 = sbr.rel (0) target = $region33
    $region32: #{tpu_custom_call.1} parent=1 // pred_region
      %225 = dma.done [#allocation3], 128
    $region33: #{tpu_custom_call.1} parent=1 // pred_fallthru
      _
    // Predicated region
    $region34: #{tpu_custom_call.1} parent=1 // pred_check
      _
    $region35: #{tpu_custom_call.1} parent=1 // pred_check_branch
      %227 = sbr.rel (0) target = $region37
    $region36: #{tpu_custom_call.1} parent=1 // pred_region
      %228 = dma.done [#allocation5], 128
    $region37: #{tpu_custom_call.1} parent=1 // pred_fallthru
      _
    %229 = vsyncpa [#allocation3], 1
    %230 = vsyncpa [#allocation5], 1

</llo_original>
